<compile_context>
chip_gen: v7x
topology: tpu7x:2x2x1
jax: 0.10.0
libtpu: 0.0.40
codegen_flags: <defaults>
</compile_context>

<pallas_src>
import jax
import jax.numpy as jnp
from jax.experimental import pallas as pl
from jax.experimental.pallas import tpu as pltpu


def critic_kernel(user_ref, server_ref,
                  wu_ref, bu_ref, ws_ref, bs_ref,
                  vu_ref, vs_ref, bh_ref,
                  out_ref):
    # Sequence mean BEFORE the projection (exact for a linear encoder).
    u_mean = jnp.mean(user_ref[...], axis=1)          # (TB, Du)
    s_mean = jnp.mean(server_ref[...], axis=1)        # (TB, Ds)

    # Encoder projections on the mean (small 2-D matmuls, f32 accumulation).
    user_all = jnp.dot(u_mean, wu_ref[...],
                       preferred_element_type=jnp.float32) + bu_ref[...]      # (TB, H)
    server_all = jnp.dot(s_mean, ws_ref[...],
                         preferred_element_type=jnp.float32) + bs_ref[...]    # (TB, H)

    # Folded fusion+output head: per-half H-vectors vu = Wf[:H] @ Wo, vs = Wf[H:] @ Wo.
    # Contract as (1, H) x (TB, H)^T so the result lands directly as a lane-dense
    # (1, TB) row -> full-width store instead of a masked (TB, 1) store.
    scores = (jnp.einsum('oh,bh->ob', vu_ref[...], user_all,
                         preferred_element_type=jnp.float32)
              + jnp.einsum('oh,bh->ob', vs_ref[...], server_all,
                           preferred_element_type=jnp.float32)
              + bh_ref[...])                                                   # (1, TB)
    out_ref[...] = scores.astype(out_ref.dtype)


def critic_net_forward(user_seq, server_seq, params, *, batch_tile=128):
    B, Lu, Du = user_seq.shape
    _, Ls, Ds = server_seq.shape
    H = params['wu'].shape[1]

    # ---- one-time wrapper-side folding (exact; tiny XLA ops) ----
    wf, wo = params['wf'], params['wo']               # (2H, H), (H, 1)
    vu = (wf[:H] @ wo).T                              # (1, H)
    vs = (wf[H:] @ wo).T                              # (1, H)
    bh = params['bf'] @ wo + params['bo']             # (1, 1)

    # ---- batch tiling (grid axis marked "parallel" for megacore / v7x 2-TC) ----
    tb = min(batch_tile, B)
    n_tiles = pl.cdiv(B, tb)
    b_pad = n_tiles * tb
    if b_pad != B:
        pad = b_pad - B
        user_seq = jnp.pad(user_seq, ((0, pad), (0, 0), (0, 0)))
        server_seq = jnp.pad(server_seq, ((0, pad), (0, 0), (0, 0)))

    # Rough VMEM budget: double-buffered per-tile inputs/output + resident weights.
    f32b = 4
    est = 2 * f32b * (tb * Lu * Du + tb * Ls * Ds + tb
                      + Du * H + Ds * H + 4 * H + 4)
    vmem_limit = int(min(max(est + (2 << 20), 4 << 20), 32 << 20))

    def full(shape):
        return pl.BlockSpec(shape, lambda i: tuple(0 for _ in shape))

    out = pl.pallas_call(
        critic_kernel,
        grid=(n_tiles,),
        in_specs=[
            pl.BlockSpec((tb, Lu, Du), lambda i: (i, 0, 0)),   # user_seq tile
            pl.BlockSpec((tb, Ls, Ds), lambda i: (i, 0, 0)),   # server_seq tile
            full((Du, H)),   # Wu
            full((1, H)),    # bu
            full((Ds, H)),   # Ws
            full((1, H)),    # bs
            full((1, H)),    # vu = (Wf[:H] @ Wo)^T
            full((1, H)),    # vs = (Wf[H:] @ Wo)^T
            full((1, 1)),    # bhead = bf @ Wo + bo
        ],
        out_specs=pl.BlockSpec((1, tb), lambda i: (0, i)),
        out_shape=jax.ShapeDtypeStruct((1, b_pad), jnp.float32),
        compiler_params=pltpu.CompilerParams(
            dimension_semantics=("parallel",),
            vmem_limit_bytes=vmem_limit,
        ),
    )(user_seq, server_seq,
      params['wu'], params['bu'], params['ws'], params['bs'],
      vu, vs, bh)

    # .squeeze(-1) of the PyTorch forward + drop batch padding (glue, outside kernel).
    return out[0, :B]


def init_params(key, user_input_dim, server_input_dim, hidden_dim):
    """Deterministic synthetic parameters (PyTorch-like uniform init ranges)."""
    ks = jax.random.split(key, 8)

    def lin(kw, kb, fan_in, fan_out):
        bound = 1.0 / jnp.sqrt(jnp.float32(fan_in))
        w = jax.random.uniform(kw, (fan_in, fan_out), jnp.float32, -bound, bound)
        b = jax.random.uniform(kb, (1, fan_out), jnp.float32, -bound, bound)
        return w, b

    wu, bu = lin(ks[0], ks[1], user_input_dim, hidden_dim)
    ws, bs = lin(ks[2], ks[3], server_input_dim, hidden_dim)
    wf, bf = lin(ks[4], ks[5], 2 * hidden_dim, hidden_dim)
    wo, bo = lin(ks[6], ks[7], hidden_dim, 1)
    return dict(wu=wu, bu=bu, ws=ws, bs=bs, wf=wf, bf=bf, wo=wo, bo=bo)


def critic_net_reference(user_seq, server_seq, p):
    """Straightforward project-then-mean reference matching the PyTorch forward."""
    user_all = jnp.mean(user_seq @ p['wu'] + p['bu'], axis=1)
    server_all = jnp.mean(server_seq @ p['ws'] + p['bs'], axis=1)
    fused = jnp.concatenate([user_all, server_all], axis=-1) @ p['wf'] + p['bf']
    return (fused @ p['wo'] + p['bo'])[:, 0]


if __name__ == "__main__":
    B = 2
    Lu, user_input_dim = 8, 6
    Ls, server_input_dim = 10, 4
    hidden_dim = 32

    key = jax.random.PRNGKey(0)
    k_u, k_s, k_p = jax.random.split(key, 3)

    user_seq = jax.random.normal(k_u, (B, Lu, user_input_dim), jnp.float32)
    server_seq = jax.random.normal(k_s, (B, Ls, server_input_dim), jnp.float32)
    params = init_params(k_p, user_input_dim, server_input_dim, hidden_dim)

    out = critic_net_forward(user_seq, server_seq, params)
    out = jax.block_until_ready(out)

    ref = critic_net_reference(user_seq, server_seq, params)
    assert out.shape == (B,)
    assert jnp.allclose(out, ref, atol=2e-4, rtol=2e-4), (out, ref)

    print("KERNEL_OK")
</pallas_src>

<mosaic_0001>
module attributes {stable_mosaic.version = 11 : i64} {
  func.func @critic_kernel(%arg0: i32, %arg1: memref<2x8x6xf32, #tpu.memory_space<vmem>>, %arg2: memref<2x10x4xf32, #tpu.memory_space<vmem>>, %arg3: memref<6x32xf32, #tpu.memory_space<vmem>>, %arg4: memref<1x32xf32, #tpu.memory_space<vmem>>, %arg5: memref<4x32xf32, #tpu.memory_space<vmem>>, %arg6: memref<1x32xf32, #tpu.memory_space<vmem>>, %arg7: memref<1x32xf32, #tpu.memory_space<vmem>>, %arg8: memref<1x32xf32, #tpu.memory_space<vmem>>, %arg9: memref<1x1xf32, #tpu.memory_space<vmem>>, %arg10: memref<1x2xf32, #tpu.memory_space<vmem>>) attributes {dimension_semantics = [#tpu.dimension_semantics<parallel>], iteration_bounds = array<i64: 1>, scalar_prefetch = 0 : i64, scratch_operands = 0 : i64, tpu.core_type = #tpu.core_type<tc>, window_params = [{transform_indices = @transform_0, window_bounds = array<i64: 2, 8, 6>}, {transform_indices = @transform_1, window_bounds = array<i64: 2, 10, 4>}, {pipeline_mode = #tpu.pipeline_mode<synchronous>, transform_indices = @transform_2, window_bounds = array<i64: 6, 32>}, {pipeline_mode = #tpu.pipeline_mode<synchronous>, transform_indices = @transform_3, window_bounds = array<i64: 1, 32>}, {pipeline_mode = #tpu.pipeline_mode<synchronous>, transform_indices = @transform_4, window_bounds = array<i64: 4, 32>}, {pipeline_mode = #tpu.pipeline_mode<synchronous>, transform_indices = @transform_5, window_bounds = array<i64: 1, 32>}, {pipeline_mode = #tpu.pipeline_mode<synchronous>, transform_indices = @transform_6, window_bounds = array<i64: 1, 32>}, {pipeline_mode = #tpu.pipeline_mode<synchronous>, transform_indices = @transform_7, window_bounds = array<i64: 1, 32>}, {pipeline_mode = #tpu.pipeline_mode<synchronous>, transform_indices = @transform_8, window_bounds = array<i64: 1, 1>}, {transform_indices = @transform_9, window_bounds = array<i64: 1, 2>}]} {
    %c0 = arith.constant 0 : index
    %c0_0 = arith.constant 0 : index
    %c0_1 = arith.constant 0 : index
    %0 = vector.load %arg1[%c0, %c0_0, %c0_1] : memref<2x8x6xf32, #tpu.memory_space<vmem>>, vector<2x8x6xf32>
    %cst = arith.constant dense<0.000000e+00> : vector<2x6xf32>
    %1 = vector.multi_reduction <add>, %0, %cst [1] : vector<2x8x6xf32> to vector<2x6xf32>
    %cst_2 = arith.constant 8.000000e+00 : f32
    %2 = vector.broadcast %cst_2 : f32 to vector<2x6xf32>
    %3 = arith.divf %1, %2 : vector<2x6xf32>
    %c0_3 = arith.constant 0 : index
    %c0_4 = arith.constant 0 : index
    %c0_5 = arith.constant 0 : index
    %4 = vector.load %arg2[%c0_3, %c0_4, %c0_5] : memref<2x10x4xf32, #tpu.memory_space<vmem>>, vector<2x10x4xf32>
    %cst_6 = arith.constant dense<0.000000e+00> : vector<2x4xf32>
    %5 = vector.multi_reduction <add>, %4, %cst_6 [1] : vector<2x10x4xf32> to vector<2x4xf32>
    %cst_7 = arith.constant 1.000000e+01 : f32
    %6 = vector.broadcast %cst_7 : f32 to vector<2x4xf32>
    %7 = arith.divf %5, %6 : vector<2x4xf32>
    %c0_8 = arith.constant 0 : index
    %c0_9 = arith.constant 0 : index
    %8 = vector.load %arg3[%c0_8, %c0_9] : memref<6x32xf32, #tpu.memory_space<vmem>>, vector<6x32xf32>
    %cst_10 = arith.constant dense<0.000000e+00> : vector<2x32xf32>
    %9 = tpu.matmul %3, %8, %cst_10 {dimension_numbers = #tpu.dot_dimension_numbers<[1], [0], [0], [1], [0, 0, 1, 1], [], []>} : vector<2x6xf32>, vector<6x32xf32>, vector<2x32xf32> -> vector<2x32xf32>
    %c0_11 = arith.constant 0 : index
    %c0_12 = arith.constant 0 : index
    %10 = vector.load %arg4[%c0_11, %c0_12] : memref<1x32xf32, #tpu.memory_space<vmem>>, vector<1x32xf32>
    %11 = vector.broadcast %10 : vector<1x32xf32> to vector<2x32xf32>
    %12 = arith.addf %9, %11 : vector<2x32xf32>
    %c0_13 = arith.constant 0 : index
    %c0_14 = arith.constant 0 : index
    %13 = vector.load %arg5[%c0_13, %c0_14] : memref<4x32xf32, #tpu.memory_space<vmem>>, vector<4x32xf32>
    %cst_15 = arith.constant dense<0.000000e+00> : vector<2x32xf32>
    %14 = tpu.matmul %7, %13, %cst_15 {dimension_numbers = #tpu.dot_dimension_numbers<[1], [0], [0], [1], [0, 0, 1, 1], [], []>} : vector<2x4xf32>, vector<4x32xf32>, vector<2x32xf32> -> vector<2x32xf32>
    %c0_16 = arith.constant 0 : index
    %c0_17 = arith.constant 0 : index
    %15 = vector.load %arg6[%c0_16, %c0_17] : memref<1x32xf32, #tpu.memory_space<vmem>>, vector<1x32xf32>
    %16 = vector.broadcast %15 : vector<1x32xf32> to vector<2x32xf32>
    %17 = arith.addf %14, %16 : vector<2x32xf32>
    %c0_18 = arith.constant 0 : index
    %c0_19 = arith.constant 0 : index
    %18 = vector.load %arg7[%c0_18, %c0_19] : memref<1x32xf32, #tpu.memory_space<vmem>>, vector<1x32xf32>
    "tpu.trace_start"() <{level = 10 : i32, message = "oh,bh->ob"}> : () -> ()
    %cst_20 = arith.constant dense<0.000000e+00> : vector<1x2xf32>
    %19 = tpu.matmul %18, %12, %cst_20 {dimension_numbers = #tpu.dot_dimension_numbers<[1], [1], [0], [0], [0, 0, 1, 0], [], []>} : vector<1x32xf32>, vector<2x32xf32>, vector<1x2xf32> -> vector<1x2xf32>
    "tpu.trace_stop"() : () -> ()
    %c0_21 = arith.constant 0 : index
    %c0_22 = arith.constant 0 : index
    %20 = vector.load %arg8[%c0_21, %c0_22] : memref<1x32xf32, #tpu.memory_space<vmem>>, vector<1x32xf32>
    "tpu.trace_start"() <{level = 10 : i32, message = "oh,bh->ob"}> : () -> ()
    %cst_23 = arith.constant dense<0.000000e+00> : vector<1x2xf32>
    %21 = tpu.matmul %20, %17, %cst_23 {dimension_numbers = #tpu.dot_dimension_numbers<[1], [1], [0], [0], [0, 0, 1, 0], [], []>} : vector<1x32xf32>, vector<2x32xf32>, vector<1x2xf32> -> vector<1x2xf32>
    "tpu.trace_stop"() : () -> ()
    %22 = arith.addf %19, %21 : vector<1x2xf32>
    %c0_24 = arith.constant 0 : index
    %c0_25 = arith.constant 0 : index
    %23 = vector.load %arg9[%c0_24, %c0_25] : memref<1x1xf32, #tpu.memory_space<vmem>>, vector<1x1xf32>
    %24 = vector.broadcast %23 : vector<1x1xf32> to vector<1x2xf32>
    %25 = arith.addf %22, %24 : vector<1x2xf32>
    %c0_26 = arith.constant 0 : index
    %c0_27 = arith.constant 0 : index
    %26 = vector.load %arg10[%c0_26, %c0_27] : memref<1x2xf32, #tpu.memory_space<vmem>>, vector<1x2xf32>
    tpu.vector_store %arg10[%c0_26, %c0_27], %25 {strides = array<i32>} : memref<1x2xf32, #tpu.memory_space<vmem>>, vector<1x2xf32>,
    return
  }
  func.func @transform_0(%arg0: i32) -> (i32, i32, i32) {
    %c0_i32 = arith.constant 0 : i32
    %c0_i32_0 = arith.constant 0 : i32
    %c0_i32_1 = arith.constant 0 : i32
    return %arg0, %c0_i32, %c0_i32_0 : i32, i32, i32
  }
  func.func @transform_1(%arg0: i32) -> (i32, i32, i32) {
    %c0_i32 = arith.constant 0 : i32
    %c0_i32_0 = arith.constant 0 : i32
    %c0_i32_1 = arith.constant 0 : i32
    return %arg0, %c0_i32, %c0_i32_0 : i32, i32, i32
  }
  func.func @transform_2(%arg0: i32) -> (i32, i32) {
    %c0_i32 = arith.constant 0 : i32
    %c0_i32_0 = arith.constant 0 : i32
    %c0_i32_1 = arith.constant 0 : i32
    return %c0_i32, %c0_i32_0 : i32, i32
  }
  func.func @transform_3(%arg0: i32) -> (i32, i32) {
    %c0_i32 = arith.constant 0 : i32
    %c0_i32_0 = arith.constant 0 : i32
    %c0_i32_1 = arith.constant 0 : i32
    return %c0_i32, %c0_i32_0 : i32, i32
  }
  func.func @transform_4(%arg0: i32) -> (i32, i32) {
    %c0_i32 = arith.constant 0 : i32
    %c0_i32_0 = arith.constant 0 : i32
    %c0_i32_1 = arith.constant 0 : i32
    return %c0_i32, %c0_i32_0 : i32, i32
  }
  func.func @transform_5(%arg0: i32) -> (i32, i32) {
    %c0_i32 = arith.constant 0 : i32
    %c0_i32_0 = arith.constant 0 : i32
    %c0_i32_1 = arith.constant 0 : i32
    return %c0_i32, %c0_i32_0 : i32, i32
  }
  func.func @transform_6(%arg0: i32) -> (i32, i32) {
    %c0_i32 = arith.constant 0 : i32
    %c0_i32_0 = arith.constant 0 : i32
    %c0_i32_1 = arith.constant 0 : i32
    return %c0_i32, %c0_i32_0 : i32, i32
  }
  func.func @transform_7(%arg0: i32) -> (i32, i32) {
    %c0_i32 = arith.constant 0 : i32
    %c0_i32_0 = arith.constant 0 : i32
    %c0_i32_1 = arith.constant 0 : i32
    return %c0_i32, %c0_i32_0 : i32, i32
  }
  func.func @transform_8(%arg0: i32) -> (i32, i32) {
    %c0_i32 = arith.constant 0 : i32
    %c0_i32_0 = arith.constant 0 : i32
    %c0_i32_1 = arith.constant 0 : i32
    return %c0_i32, %c0_i32_0 : i32, i32
  }
  func.func @transform_9(%arg0: i32) -> (i32, i32) {
    %c0_i32 = arith.constant 0 : i32
    %c0_i32_0 = arith.constant 0 : i32
    return %c0_i32, %arg0 : i32, i32
  }
}

</mosaic_0001>

<llo_original>
// kernel: tpu_custom_call.1
$region0: #{tpu_custom_call.1}
  #allocation0 [shape = 'u32[]', space=smem, size = 0x4, offset = 0x4, fixed_abs, tag = 'smem constant byte address 0x4 - core index']
  #allocation1 [shape = 'u32[144,128]{1,0:T(1,128)}', space=vmem, size = 0x12000, scoped, tag = 'internal scratch']
  #allocation2 [shape = 'f32[1,1]{1,0:T(1,128)S(1)}', space=vmem, size = 0x200, scoped, tag = 'scoped memory for tpu_custom_call.1']
  %s0 = inlined_call_operand.vmem [shape: f32[2,8,6], index: 0, kind: input, shape index: {}]
  %s1 = inlined_call_operand.vmem [shape: f32[2,10,4], index: 1, kind: input, shape index: {}]
  %s2 = inlined_call_operand.vmem [shape: f32[6,32], index: 2, kind: input, shape index: {}]
  %s3 = inlined_call_operand.vmem [shape: f32[1,32], index: 3, kind: input, shape index: {}]
  %s4 = inlined_call_operand.vmem [shape: f32[4,32], index: 4, kind: input, shape index: {}]
  %s5 = inlined_call_operand.vmem [shape: f32[1,32], index: 5, kind: input, shape index: {}]
  %s6 = inlined_call_operand.vmem [shape: f32[1,32], index: 6, kind: input, shape index: {}]
  %s7 = inlined_call_operand.vmem [shape: f32[1,32], index: 7, kind: input, shape index: {}]
  %s8 = inlined_call_operand.<no memory space> [shape: f32[1,1], index: 8, kind: input, shape index: {}]
  %s9 = inlined_call_operand.hbm [shape: f32[1,2], index: 9, kind: output, shape index: {}]
  %s10 = sld [smem:[#allocation0]]
  $region46: #{tpu_custom_call.1} parent=0
    _
  %s12 = ssub.s32 1, %s10
  %s13 = scalar_select 0, %s12, %s10
  %v14 = vstv %s8
  %15 = vst [vmem:[#allocation2] sm:$0x1] %v14
  $region1: #{tpu_custom_call.1} parent=0
    #allocation3 [shape = 'u8[512]{0}', space=vmem, size = 0x400, scoped, tag = 'output window, operand 0, single buffered']
    #allocation4 [shape = 's32[1]{0}', space=sflag, size = 0x4, scoped, tag = 'scoped memory for tpu_custom_call.1']
    %16 = vsyncpa [#allocation4], 0
    // Predicated region
    $region2: #{tpu_custom_call.1} parent=1 // pred_check
      _
    $region3: #{tpu_custom_call.1} parent=1 // pred_check_branch
      %18 = sbr.rel (0) target = $region5
    $region4: #{tpu_custom_call.1} parent=1 // pred_region
      _
    $region5: #{tpu_custom_call.1} parent=1 // pred_fallthru
      _
    // Predicated region
    $region6: #{tpu_custom_call.1} parent=1 // pred_check
      _
    $region7: #{tpu_custom_call.1} parent=1 // pred_check_branch
      %20 = sbr.rel (0) target = $region9
    $region8: #{tpu_custom_call.1} parent=1 // pred_region
      _
    $region9: #{tpu_custom_call.1} parent=1 // pred_fallthru
      _
    // Predicated region
    $region10: #{tpu_custom_call.1} parent=1 // pred_check
      _
    $region11: #{tpu_custom_call.1} parent=1 // pred_check_branch
      %22 = sbr.rel (0) target = $region13
    $region12: #{tpu_custom_call.1} parent=1 // pred_region
      _
    $region13: #{tpu_custom_call.1} parent=1 // pred_fallthru
      _
    // Predicated region
    $region14: #{tpu_custom_call.1} parent=1 // pred_check
      _
    $region15: #{tpu_custom_call.1} parent=1 // pred_check_branch
      %24 = sbr.rel (0) target = $region17
    $region16: #{tpu_custom_call.1} parent=1 // pred_region
      _
    $region17: #{tpu_custom_call.1} parent=1 // pred_fallthru
      _
    // Predicated region
    $region18: #{tpu_custom_call.1} parent=1 // pred_check
      _
    $region19: #{tpu_custom_call.1} parent=1 // pred_check_branch
      %26 = sbr.rel (0) target = $region21
    $region20: #{tpu_custom_call.1} parent=1 // pred_region
      _
    $region21: #{tpu_custom_call.1} parent=1 // pred_fallthru
      _
    // Predicated region
    $region22: #{tpu_custom_call.1} parent=1 // pred_check
      _
    $region23: #{tpu_custom_call.1} parent=1 // pred_check_branch
      %28 = sbr.rel (0) target = $region25
    $region24: #{tpu_custom_call.1} parent=1 // pred_region
      _
    $region25: #{tpu_custom_call.1} parent=1 // pred_fallthru
      _
    // Predicated region
    $region26: #{tpu_custom_call.1} parent=1 // pred_check
      _
    $region27: #{tpu_custom_call.1} parent=1 // pred_check_branch
      %30 = sbr.rel (0) target = $region29
    $region28: #{tpu_custom_call.1} parent=1 // pred_region
      _
    $region29: #{tpu_custom_call.1} parent=1 // pred_fallthru
      _
    // Predicated region
    $region30: #{tpu_custom_call.1} parent=1 // pred_check
      _
    $region31: #{tpu_custom_call.1} parent=1 // pred_check_branch
      %32 = sbr.rel (0) target = $region33
    $region32: #{tpu_custom_call.1} parent=1 // pred_region
      _
    $region33: #{tpu_custom_call.1} parent=1 // pred_fallthru
      _
    // Predicated region
    $region34: #{tpu_custom_call.1} parent=1 // pred_check
      _
    $region35: #{tpu_custom_call.1} parent=1 // pred_check_branch
      %34 = sbr.rel (0) target = $region37
    $region36: #{tpu_custom_call.1} parent=1 // pred_region
      _
    $region37: #{tpu_custom_call.1} parent=1 // pred_fallthru
      _
    %v35 = vld [vmem:[%s0] sm:$0xff]
    %v36 = vld [vmem:[%s0 + $0x8] sm:$0xff]
    %vm37 = vcmask 48128
    %v38 = vsel %vm37, %v35, 0.0
    %v39 = vrot.slane %v38, 4
    %v40 = vadd.f32 %v38, %v39
    %v41 = vrot.slane %v40, 2
    %v42 = vadd.f32 %v40, %v41
    %v43 = vrot.slane %v42, 1
    %v44 = vadd.f32 %v42, %v43
    %v45 = vsel %vm37, %v36, 0.0
    %v46 = vrot.slane %v45, 4
    %v47 = vadd.f32 %v45, %v46
    %v48 = vrot.slane %v47, 2
    %v49 = vadd.f32 %v47, %v48
    %v50 = vrot.slane %v49, 1
    %v51 = vadd.f32 %v49, %v50
    %v52 = vrcp.pop 8.0
    %v53 = vmul.f32 %v44, %v52
    %v54 = vmul.f32 %v51, %v52
    %v55 = vld [vmem:[%s1] sm:$0xff]
    %v56 = vld [vmem:[%s1 + $0x8] sm:$0x3]
    %v57 = vld [vmem:[%s1 + $0x10] sm:$0xff]
    %v58 = vld [vmem:[%s1 + $0x18] sm:$0x3]
    %vm59 = vcmask 31744
    %v60 = vsel %vm59, %v55, 0.0
    %vm61 = vcmask 25600
    %v62 = vsel %vm61, %v56, 0.0
    %v63 = vadd.f32 %v60, %v62
    %v64 = vrot.slane %v63, 4
    %v65 = vadd.f32 %v63, %v64
    %v66 = vrot.slane %v65, 2
    %v67 = vadd.f32 %v65, %v66
    %v68 = vrot.slane %v67, 1
    %v69 = vadd.f32 %v67, %v68
    %v70 = vsel %vm59, %v57, 0.0
    %v71 = vsel %vm61, %v58, 0.0
    %v72 = vadd.f32 %v70, %v71
    %v73 = vrot.slane %v72, 4
    %v74 = vadd.f32 %v72, %v73
    %v75 = vrot.slane %v74, 2
    %v76 = vadd.f32 %v74, %v75
    %v77 = vrot.slane %v76, 1
    %v78 = vadd.f32 %v76, %v77
    %v79 = vrcp.pop 10.0
    %v80 = vmul.f32 %v69, %v79
    %v81 = vmul.f32 %v78, %v79
    %v82 = vld [vmem:[%s2] sm:$0x3f]
    %v83 = vld [vmem:[%s3] sm:$0x1]
    %v85 = vlaneseq
    %v86 = vshrl.u32 %v85, 7
    %v87 = vsub.s32 0, %v86
    %v88 = vrot.slane %v83, %v87
    %vm92 = vcmask 1041409
    %v93 = vsel %vm92, %v54, %v53
    %v94 = vsel %vm37, %v93, 0
    %vm96 = vcmask 1045504
    %v98 = vsel %vm96, %v82, 0
    %100 = vmatprep.subr.mxu0 0.0
    %101 = vmatpush1.msra.mxu0 %v98
    %102 = vmatprep.subr.mxu0 0.0
    %103 = vmatpush1.msra.mxu0 0.0
    %104 = vmatprep.subr.mxu0 0.0
    %105 = vmatpush1.msra.mxu0 0.0
    %106 = vmatprep.subr.mxu0 0.0
    %107 = vmatpush1.msra.mxu0 0.0
    %108 = vmatprep.subr.mxu0 0.0
    %109 = vmatpush1.msra.mxu0 0.0
    %110 = vmatprep.subr.mxu0 0.0
    %111 = vmatpush1.msra.mxu0 0.0
    %112 = vmatprep.subr.mxu0 0.0
    %113 = vmatpush1.msra.mxu0 0.0
    %114 = vmatprep.subr.mxu0 0.0
    %115 = vmatpush1.msra.mxu0 0.0
    %116 = vmatprep.subr.mxu0 0.0
    %117 = vmatpush1.msra.mxu0 0.0
    %118 = vmatprep.subr.mxu0 0.0
    %119 = vmatpush1.msra.mxu0 0.0
    %120 = vmatprep.subr.mxu0 0.0
    %121 = vmatpush1.msra.mxu0 0.0
    %122 = vmatprep.subr.mxu0 0.0
    %123 = vmatpush1.msra.mxu0 0.0
    %124 = vmatprep.subr.mxu0 0.0
    %125 = vmatpush1.msra.mxu0 0.0
    %126 = vmatprep.subr.mxu0 0.0
    %127 = vmatpush1.msra.mxu0 0.0
    %128 = vmatprep.subr.mxu0 0.0
    %129 = vmatpush1.msra.mxu0 0.0
    %130 = vmatprep.subr.mxu0 0.0
    %131 = vmatpush1.msra.mxu0 0.0
    %132 = vmatprep.subr.mxu0 0.0
    %133 = vmatpush1.msra.mxu0 0.0
    %134 = vmatprep.subr.mxu0 0.0
    %135 = vmatpush1.msra.mxu0 0.0
    %136 = vmatprep.subr.mxu0 0.0
    %137 = vmatpush1.msra.mxu0 0.0
    %138 = vmatprep.subr.mxu0 0.0
    %139 = vmatpush1.msra.mxu0 0.0
    %140 = vmatprep.subr.mxu0 0.0
    %141 = vmatpush1.msra.mxu0 0.0
    %142 = vmatprep.subr.mxu0 0.0
    %143 = vmatpush1.msra.mxu0 0.0
    %144 = vmatprep.subr.mxu0 0.0
    %145 = vmatpush1.msra.mxu0 0.0
    %146 = vmatprep.subr.mxu0 0.0
    %147 = vmatpush1.msra.mxu0 0.0
    %148 = vmatprep.subr.mxu0 0.0
    %149 = vmatpush1.msra.mxu0 0.0
    %150 = vmatprep.subr.mxu0 0.0
    %151 = vmatpush1.msra.mxu0 0.0
    %152 = vmatprep.subr.mxu0 0.0
    %153 = vmatpush1.msra.mxu0 0.0
    %154 = vmatprep.subr.mxu0 0.0
    %155 = vmatpush1.msra.mxu0 0.0
    %156 = vmatprep.subr.mxu0 0.0
    %157 = vmatpush1.msra.mxu0 0.0
    %158 = vmatprep.subr.mxu0 0.0
    %159 = vmatpush1.msra.mxu0 0.0
    %160 = vmatprep.subr.mxu0 0.0
    %161 = vmatpush1.msra.mxu0 0.0
    %162 = vmatprep.subr.mxu0 0.0
    %163 = vmatpush1.msra.mxu0 0.0
    %164 = vmatprep.mubr.f32.mxu0 0.0
    %165 = vmatmul.mubr.f32.gmra.mrb[0].mxu0 %v94
    %v166 = vpop.f32.mrb[0].mxu0
    %v167 = vadd.f32 %v88, %v166
    %v168 = vpop.f32.mrb[0].mxu0
    %169 = vdwg.mxu0
    %v170 = vld [vmem:[%s4] sm:$0xf]
    %v171 = vld [vmem:[%s5] sm:$0x1]
    %v173 = vlaneseq
    %v174 = vshrl.u32 %v173, 7
    %v175 = vsub.s32 0, %v174
    %v176 = vrot.slane %v171, %v175
    %v180 = vsel %vm92, %v81, %v80
    %v181 = vsel %vm59, %v180, 0
    %vm183 = vcmask 1043456
    %v185 = vsel %vm183, %v170, 0
    %187 = vmatprep.subr.mxu0 0.0
    %188 = vmatpush1.msra.mxu0 %v185
    %189 = vmatprep.subr.mxu0 0.0
    %190 = vmatpush1.msra.mxu0 0.0
    %191 = vmatprep.subr.mxu0 0.0
    %192 = vmatpush1.msra.mxu0 0.0
    %193 = vmatprep.subr.mxu0 0.0
    %194 = vmatpush1.msra.mxu0 0.0
    %195 = vmatprep.subr.mxu0 0.0
    %196 = vmatpush1.msra.mxu0 0.0
    %197 = vmatprep.subr.mxu0 0.0
    %198 = vmatpush1.msra.mxu0 0.0
    %199 = vmatprep.subr.mxu0 0.0
    %200 = vmatpush1.msra.mxu0 0.0
    %201 = vmatprep.subr.mxu0 0.0
    %202 = vmatpush1.msra.mxu0 0.0
    %203 = vmatprep.subr.mxu0 0.0
    %204 = vmatpush1.msra.mxu0 0.0
    %205 = vmatprep.subr.mxu0 0.0
    %206 = vmatpush1.msra.mxu0 0.0
    %207 = vmatprep.subr.mxu0 0.0
    %208 = vmatpush1.msra.mxu0 0.0
    %209 = vmatprep.subr.mxu0 0.0
    %210 = vmatpush1.msra.mxu0 0.0
    %211 = vmatprep.subr.mxu0 0.0
    %212 = vmatpush1.msra.mxu0 0.0
    %213 = vmatprep.subr.mxu0 0.0
    %214 = vmatpush1.msra.mxu0 0.0
    %215 = vmatprep.subr.mxu0 0.0
    %216 = vmatpush1.msra.mxu0 0.0
    %217 = vmatprep.subr.mxu0 0.0
    %218 = vmatpush1.msra.mxu0 0.0
    %219 = vmatprep.subr.mxu0 0.0
    %220 = vmatpush1.msra.mxu0 0.0
    %221 = vmatprep.subr.mxu0 0.0
    %222 = vmatpush1.msra.mxu0 0.0
    %223 = vmatprep.subr.mxu0 0.0
    %224 = vmatpush1.msra.mxu0 0.0
    %225 = vmatprep.subr.mxu0 0.0
    %226 = vmatpush1.msra.mxu0 0.0
    %227 = vmatprep.subr.mxu0 0.0
    %228 = vmatpush1.msra.mxu0 0.0
    %229 = vmatprep.subr.mxu0 0.0
    %230 = vmatpush1.msra.mxu0 0.0
    %231 = vmatprep.subr.mxu0 0.0
    %232 = vmatpush1.msra.mxu0 0.0
    %233 = vmatprep.subr.mxu0 0.0
    %234 = vmatpush1.msra.mxu0 0.0
    %235 = vmatprep.subr.mxu0 0.0
    %236 = vmatpush1.msra.mxu0 0.0
    %237 = vmatprep.subr.mxu0 0.0
    %238 = vmatpush1.msra.mxu0 0.0
    %239 = vmatprep.subr.mxu0 0.0
    %240 = vmatpush1.msra.mxu0 0.0
    %241 = vmatprep.subr.mxu0 0.0
    %242 = vmatpush1.msra.mxu0 0.0
    %243 = vmatprep.subr.mxu0 0.0
    %244 = vmatpush1.msra.mxu0 0.0
    %245 = vmatprep.subr.mxu0 0.0
    %246 = vmatpush1.msra.mxu0 0.0
    %247 = vmatprep.subr.mxu0 0.0
    %248 = vmatpush1.msra.mxu0 0.0
    %249 = vmatprep.subr.mxu0 0.0
    %250 = vmatpush1.msra.mxu0 0.0
    %251 = vmatprep.mubr.f32.mxu0 0.0
    %252 = vmatmul.mubr.f32.gmra.mrb[0].mxu0 %v181
    %v253 = vpop.f32.mrb[0].mxu0
    %v254 = vadd.f32 %v176, %v253
    %v255 = vpop.f32.mrb[0].mxu0
    %256 = vdwg.mxu0
    %v257 = vld [vmem:[%s6] sm:$0x1]
    %v258 = vld [vmem:[%s7] sm:$0x1]
    %vm259 = vcmask 261120
    %v261 = vsel %vm259, %v258, 0
    %v264 = vsel %vm259, %v254, 0
    %266 = vmatprep.subr.mxu0 0.0
    %267 = vmatpush1.xpose.msra.mxu0 %v264
    %268 = vmatprep.subr.mxu0 0.0
    %269 = vmatpush1.xpose.msra.mxu0 0.0
    %270 = vmatprep.subr.mxu0 0.0
    %271 = vmatpush1.xpose.msra.mxu0 0.0
    %272 = vmatprep.subr.mxu0 0.0
    %273 = vmatpush1.xpose.msra.mxu0 0.0
    %274 = vmatprep.subr.mxu0 0.0
    %275 = vmatpush1.xpose.msra.mxu0 0.0
    %276 = vmatprep.subr.mxu0 0.0
    %277 = vmatpush1.xpose.msra.mxu0 0.0
    %278 = vmatprep.subr.mxu0 0.0
    %279 = vmatpush1.xpose.msra.mxu0 0.0
    %280 = vmatprep.subr.mxu0 0.0
    %281 = vmatpush1.xpose.msra.mxu0 0.0
    %282 = vmatprep.subr.mxu0 0.0
    %283 = vmatpush1.xpose.msra.mxu0 0.0
    %284 = vmatprep.subr.mxu0 0.0
    %285 = vmatpush1.xpose.msra.mxu0 0.0
    %286 = vmatprep.subr.mxu0 0.0
    %287 = vmatpush1.xpose.msra.mxu0 0.0
    %288 = vmatprep.subr.mxu0 0.0
    %289 = vmatpush1.xpose.msra.mxu0 0.0
    %290 = vmatprep.subr.mxu0 0.0
    %291 = vmatpush1.xpose.msra.mxu0 0.0
    %292 = vmatprep.subr.mxu0 0.0
    %293 = vmatpush1.xpose.msra.mxu0 0.0
    %294 = vmatprep.subr.mxu0 0.0
    %295 = vmatpush1.xpose.msra.mxu0 0.0
    %296 = vmatprep.subr.mxu0 0.0
    %297 = vmatpush1.xpose.msra.mxu0 0.0
    %298 = vmatprep.subr.mxu0 0.0
    %299 = vmatpush1.xpose.msra.mxu0 0.0
    %300 = vmatprep.subr.mxu0 0.0
    %301 = vmatpush1.xpose.msra.mxu0 0.0
    %302 = vmatprep.subr.mxu0 0.0
    %303 = vmatpush1.xpose.msra.mxu0 0.0
    %304 = vmatprep.subr.mxu0 0.0
    %305 = vmatpush1.xpose.msra.mxu0 0.0
    %306 = vmatprep.subr.mxu0 0.0
    %307 = vmatpush1.xpose.msra.mxu0 0.0
    %308 = vmatprep.subr.mxu0 0.0
    %309 = vmatpush1.xpose.msra.mxu0 0.0
    %310 = vmatprep.subr.mxu0 0.0
    %311 = vmatpush1.xpose.msra.mxu0 0.0
    %312 = vmatprep.subr.mxu0 0.0
    %313 = vmatpush1.xpose.msra.mxu0 0.0
    %314 = vmatprep.subr.mxu0 0.0
    %315 = vmatpush1.xpose.msra.mxu0 0.0
    %316 = vmatprep.subr.mxu0 0.0
    %317 = vmatpush1.xpose.msra.mxu0 0.0
    %318 = vmatprep.subr.mxu0 0.0
    %319 = vmatpush1.xpose.msra.mxu0 0.0
    %320 = vmatprep.subr.mxu0 0.0
    %321 = vmatpush1.xpose.msra.mxu0 0.0
    %322 = vmatprep.subr.mxu0 0.0
    %323 = vmatpush1.xpose.msra.mxu0 0.0
    %324 = vmatprep.subr.mxu0 0.0
    %325 = vmatpush1.xpose.msra.mxu0 0.0
    %326 = vmatprep.subr.mxu0 0.0
    %327 = vmatpush1.xpose.msra.mxu0 0.0
    %328 = vmatprep.subr.mxu0 0.0
    %329 = vmatpush1.xpose.msra.mxu0 0.0
    %330 = vmatprep.mubr.f32.mxu0 0.0
    %331 = vmatmul.mubr.f32.gmra.mrb[0].mxu0 %v261
    %v332 = vpop.f32.mrb[0].mxu0
    %v333 = vadd.f32 0.0, %v332
    %v334 = vpop.f32.mrb[0].mxu0
    %335 = vdwg.mxu0
    %v337 = vsel %vm259, %v257, 0
    %v340 = vsel %vm259, %v167, 0
    %342 = vmatprep.subr.mxu0 0.0
    %343 = vmatpush1.xpose.msra.mxu0 %v340
    %344 = vmatprep.subr.mxu0 0.0
    %345 = vmatpush1.xpose.msra.mxu0 0.0
    %346 = vmatprep.subr.mxu0 0.0
    %347 = vmatpush1.xpose.msra.mxu0 0.0
    %348 = vmatprep.subr.mxu0 0.0
    %349 = vmatpush1.xpose.msra.mxu0 0.0
    %350 = vmatprep.subr.mxu0 0.0
    %351 = vmatpush1.xpose.msra.mxu0 0.0
    %352 = vmatprep.subr.mxu0 0.0
    %353 = vmatpush1.xpose.msra.mxu0 0.0
    %354 = vmatprep.subr.mxu0 0.0
    %355 = vmatpush1.xpose.msra.mxu0 0.0
    %356 = vmatprep.subr.mxu0 0.0
    %357 = vmatpush1.xpose.msra.mxu0 0.0
    %358 = vmatprep.subr.mxu0 0.0
    %359 = vmatpush1.xpose.msra.mxu0 0.0
    %360 = vmatprep.subr.mxu0 0.0
    %361 = vmatpush1.xpose.msra.mxu0 0.0
    %362 = vmatprep.subr.mxu0 0.0
    %363 = vmatpush1.xpose.msra.mxu0 0.0
    %364 = vmatprep.subr.mxu0 0.0
    %365 = vmatpush1.xpose.msra.mxu0 0.0
    %366 = vmatprep.subr.mxu0 0.0
    %367 = vmatpush1.xpose.msra.mxu0 0.0
    %368 = vmatprep.subr.mxu0 0.0
    %369 = vmatpush1.xpose.msra.mxu0 0.0
    %370 = vmatprep.subr.mxu0 0.0
    %371 = vmatpush1.xpose.msra.mxu0 0.0
    %372 = vmatprep.subr.mxu0 0.0
    %373 = vmatpush1.xpose.msra.mxu0 0.0
    %374 = vmatprep.subr.mxu0 0.0
    %375 = vmatpush1.xpose.msra.mxu0 0.0
    %376 = vmatprep.subr.mxu0 0.0
    %377 = vmatpush1.xpose.msra.mxu0 0.0
    %378 = vmatprep.subr.mxu0 0.0
    %379 = vmatpush1.xpose.msra.mxu0 0.0
    %380 = vmatprep.subr.mxu0 0.0
    %381 = vmatpush1.xpose.msra.mxu0 0.0
    %382 = vmatprep.subr.mxu0 0.0
    %383 = vmatpush1.xpose.msra.mxu0 0.0
    %384 = vmatprep.subr.mxu0 0.0
    %385 = vmatpush1.xpose.msra.mxu0 0.0
    %386 = vmatprep.subr.mxu0 0.0
    %387 = vmatpush1.xpose.msra.mxu0 0.0
    %388 = vmatprep.subr.mxu0 0.0
    %389 = vmatpush1.xpose.msra.mxu0 0.0
    %390 = vmatprep.subr.mxu0 0.0
    %391 = vmatpush1.xpose.msra.mxu0 0.0
    %392 = vmatprep.subr.mxu0 0.0
    %393 = vmatpush1.xpose.msra.mxu0 0.0
    %394 = vmatprep.subr.mxu0 0.0
    %395 = vmatpush1.xpose.msra.mxu0 0.0
    %396 = vmatprep.subr.mxu0 0.0
    %397 = vmatpush1.xpose.msra.mxu0 0.0
    %398 = vmatprep.subr.mxu0 0.0
    %399 = vmatpush1.xpose.msra.mxu0 0.0
    %400 = vmatprep.subr.mxu0 0.0
    %401 = vmatpush1.xpose.msra.mxu0 0.0
    %402 = vmatprep.subr.mxu0 0.0
    %403 = vmatpush1.xpose.msra.mxu0 0.0
    %404 = vmatprep.subr.mxu0 0.0
    %405 = vmatpush1.xpose.msra.mxu0 0.0
    %406 = vmatprep.mubr.f32.mxu0 0.0
    %407 = vmatmul.mubr.f32.gmra.mrb[0].mxu0 %v337
    %v408 = vpop.f32.mrb[0].mxu0
    %v409 = vadd.f32 %v333, %v408
    %v410 = vpop.f32.mrb[0].mxu0
    %411 = vdwg.mxu0
    %v412 = vld [vmem:[#allocation2] sm:$0x1]
    %414 = vset.pattern.permute.xlu0 0
    %415 = vperm.xlu0 %414, %v412
    %v416 = vpop.permute.xlu0 %415
    %v418 = vlaneseq
    %v419 = vshrl.u32 %v418, 7
    %v420 = vsub.s32 0, %v419
    %v421 = vrot.slane %v416, %v420
    %v422 = vadd.f32 %v409, %v421
    %vm423 = vcmask 8192
    %424 = vst.msk [vmem:[#allocation3] sm:$0x1] %vm423, %v422
    // Predicated region
    $region38: #{tpu_custom_call.1} parent=1 // pred_check
      _
    $region39: #{tpu_custom_call.1} parent=1 // pred_check_branch
      %426 = sbr.rel (0) target = $region41
    $region40: #{tpu_custom_call.1} parent=1 // pred_region
      %s428 = ssub.s32 16, 16
      %429 = vsyncadd [#allocation4], %s428
      %s431 = sshll.u32 [#allocation3], 4
      %s432 = int_to_ptr.vmem [resolvable:$true] %s431
      %434 = dma.vmem_to_hbm [thread:$0]  %s432, 16, %s9, [#allocation4]
    $region41: #{tpu_custom_call.1} parent=1 // pred_fallthru
      _
    // Predicated region
    $region42: #{tpu_custom_call.1} parent=1 // pred_check
      _
    $region43: #{tpu_custom_call.1} parent=1 // pred_check_branch
      %436 = sbr.rel (0) target = $region45
    $region44: #{tpu_custom_call.1} parent=1 // pred_region
      %437 = dma.done [#allocation4], 16
    $region45: #{tpu_custom_call.1} parent=1 // pred_fallthru
      _
    %438 = vsyncpa [#allocation4], 1

</llo_original>
